<compile_context>
chip_gen: v7x
topology: tpu7x:2x2x1
jax: 0.10.0
libtpu: 0.0.40
codegen_flags: <defaults>
</compile_context>

<pallas_src>
import jax
import jax.numpy as jnp
from jax.experimental import pallas as pl
from jax.experimental.pallas import tpu as pltpu

EPSILON = 1e-07
_LANE = 128
_TARGET_TILE_ROWS = 8192  # ~4 MiB f32 block -> ~16 MiB VMEM with 2-deep in+out


def _quater_math(x):
    """Exact forward-pass math of My_Quater, computed in f32."""
    xf = x.astype(jnp.float32)
    ax = jnp.abs(xf)                      # where(x>0, x, -x)
    ax = jnp.where(ax > 0, ax, EPSILON)   # clamp *exact* zeros only (matches torch.where)
    val = jax.lax.rsqrt(jnp.sqrt(ax))     # |x|^(-0.25) on the EUP path
    return jnp.where(xf >= 0, val, -val).astype(x.dtype)


def _quater_kernel(x_ref, o_ref):
    o_ref[...] = _quater_math(x_ref[...]).astype(o_ref.dtype)


def _num_tensorcores():
    """Best-effort query of TensorCores per chip (v7x=2, v5e/v6e=1)."""
    try:
        info = pltpu.get_tpu_info()
        for name in ("num_cores", "core_count", "num_tensorcores",
                     "tensor_cores", "cores_per_chip"):
            v = getattr(info, name, None)
            if isinstance(v, int) and v >= 1:
                return v
    except Exception:
        pass
    try:
        kind = jax.devices()[0].device_kind.lower()
        if "v7" in kind:
            return 2
    except Exception:
        pass
    return 1


def _choose_tile_rows(rows, sublane, num_cores):
    cap = _TARGET_TILE_ROWS
    if num_cores <= 1:
        # Serial grid (v5e/v6e): biggest legal block; full-array block when it fits.
        return rows if rows <= cap else cap
    # Multi-TC megacore (v7x): steps % num_cores == 0 with near-equal blocks.
    if rows <= sublane * num_cores:
        return rows  # too small to split usefully
    steps = max(pl.cdiv(rows, cap), num_cores)
    if rows > 4 * num_cores * sublane and steps < 2 * num_cores:
        steps = 2 * num_cores  # >=4 steps so the ragged last block can't skew one core
    steps = ((steps + num_cores - 1) // num_cores) * num_cores
    tile = ((pl.cdiv(rows, steps) + sublane - 1) // sublane) * sublane
    return max(sublane, min(tile, rows))


def my_quater(x, sign=1):
    # `sign` is unused in the reference forward pass; kept for interface parity.
    orig_shape = x.shape
    orig_dtype = x.dtype
    n = x.size
    if n == 0:
        return x

    flat = x.reshape(-1)
    n_main = (n // _LANE) * _LANE

    if n_main == 0:
        # Tiny input (<128 elements): not worth a kernel launch.
        return _quater_math(flat).reshape(orig_shape)

    main = flat if n_main == n else flat[:n_main]
    rows = n_main // _LANE
    x2d = main.reshape(rows, _LANE)

    itemsize = jnp.dtype(orig_dtype).itemsize
    sublane = {4: 8, 2: 16, 1: 32}.get(itemsize, 8)
    tile_rows = _choose_tile_rows(rows, sublane, _num_tensorcores())
    grid = (pl.cdiv(rows, tile_rows),)

    out2d = pl.pallas_call(
        _quater_kernel,
        out_shape=jax.ShapeDtypeStruct((rows, _LANE), orig_dtype),
        grid_spec=pltpu.PrefetchScalarGridSpec(
            num_scalar_prefetch=0,
            grid=grid,
            in_specs=[pl.BlockSpec((tile_rows, _LANE), lambda i: (i, 0))],
            out_specs=pl.BlockSpec((tile_rows, _LANE), lambda i: (i, 0)),
        ),
        compiler_params=pltpu.CompilerParams(
            dimension_semantics=("parallel",),
            # Explicit scoped-VMEM budget: 2-deep pipeline of 4 MiB in + 4 MiB
            # out blocks fits comfortably even on v5e's 16 MiB default-limited
            # / v7x's 64 MiB physical VMEM.
            vmem_limit_bytes=32 * 1024 * 1024,
        ),
    )(x2d)

    out_flat = out2d.reshape(-1)
    if n_main != n:
        # <=127-element tail: trivial jnp math, no full-array pad/slice copies.
        tail_out = _quater_math(flat[n_main:])
        out_flat = jnp.concatenate([out_flat, tail_out])
    return out_flat.reshape(orig_shape)


def _reference(x):
    # Pure-JAX reference mirroring the PyTorch forward exactly.
    one = jnp.ones_like(x)
    out = jnp.where(x > 0, x, -x)
    out = jnp.where(out > 0, out, EPSILON * one)
    out = out ** (-0.25)
    return jnp.where(x >= 0, out, -out)


if __name__ == "__main__":
    key = jax.random.PRNGKey(0)
    x = jax.random.normal(key, (2, 4, 16, 16), dtype=jnp.float32)
    out = my_quater(x, sign=1)
    out = jax.block_until_ready(out)

    ref = _reference(x)
    assert out.shape == x.shape and out.dtype == x.dtype
    assert jnp.allclose(out, ref, rtol=1e-5, atol=1e-5), "mismatch vs reference"

    # also exercise a ragged (non-multiple-of-128) size to cover the tail path
    x2 = jax.random.normal(jax.random.PRNGKey(1), (3, 5, 7), dtype=jnp.float32)
    out2 = jax.block_until_ready(my_quater(x2))
    assert jnp.allclose(out2, _reference(x2), rtol=1e-5, atol=1e-5), "ragged mismatch"

    print("KERNEL_OK")
</pallas_src>

<mosaic_0001>
module attributes {stable_mosaic.version = 11 : i64} {
  func.func @_quater_kernel(%arg0: i32, %arg1: memref<16x128xf32, #tpu.memory_space<vmem>>, %arg2: memref<16x128xf32, #tpu.memory_space<vmem>>) attributes {dimension_semantics = [#tpu.dimension_semantics<parallel>], iteration_bounds = array<i64: 1>, scalar_prefetch = 0 : i64, scratch_operands = 0 : i64, tpu.core_type = #tpu.core_type<tc>, window_params = [{transform_indices = @transform_0, window_bounds = array<i64: 16, 128>}, {transform_indices = @transform_1, window_bounds = array<i64: 16, 128>}]} {
    %c0 = arith.constant 0 : index
    %c0_0 = arith.constant 0 : index
    %0 = vector.load %arg1[%c0, %c0_0] : memref<16x128xf32, #tpu.memory_space<vmem>>, vector<16x128xf32>
    %1 = math.absf %0 : vector<16x128xf32>
    %cst = arith.constant 0.000000e+00 : f32
    %2 = vector.broadcast %cst : f32 to vector<16x128xf32>
    %3 = arith.cmpf ogt, %1, %2 : vector<16x128xf32>
    %cst_1 = arith.constant 1.000000e-07 : f32
    %4 = vector.broadcast %cst_1 : f32 to vector<16x128xf32>
    %5 = arith.select %3, %1, %4 : vector<16x128xi1>, vector<16x128xf32>
    %6 = math.sqrt %5 : vector<16x128xf32>
    %7 = math.rsqrt %6 : vector<16x128xf32>
    %cst_2 = arith.constant 0.000000e+00 : f32
    %8 = vector.broadcast %cst_2 : f32 to vector<16x128xf32>
    %9 = arith.cmpf oge, %0, %8 : vector<16x128xf32>
    %cst_3 = arith.constant 0.000000e+00 : f32
    %10 = vector.broadcast %cst_3 : f32 to vector<16x128xf32>
    %11 = arith.subf %10, %7 : vector<16x128xf32>
    %12 = arith.select %9, %7, %11 : vector<16x128xi1>, vector<16x128xf32>
    %c0_4 = arith.constant 0 : index
    %c0_5 = arith.constant 0 : index
    %13 = vector.load %arg2[%c0_4, %c0_5] : memref<16x128xf32, #tpu.memory_space<vmem>>, vector<16x128xf32>
    tpu.vector_store %arg2[%c0_4, %c0_5], %12 {strides = array<i32>} : memref<16x128xf32, #tpu.memory_space<vmem>>, vector<16x128xf32>,
    return
  }
  func.func @transform_0(%arg0: i32) -> (i32, i32) {
    %c0_i32 = arith.constant 0 : i32
    %c0_i32_0 = arith.constant 0 : i32
    return %arg0, %c0_i32 : i32, i32
  }
  func.func @transform_1(%arg0: i32) -> (i32, i32) {
    %c0_i32 = arith.constant 0 : i32
    %c0_i32_0 = arith.constant 0 : i32
    return %arg0, %c0_i32 : i32, i32
  }
}

</mosaic_0001>

<llo_original>
// kernel: tpu_custom_call.1
$region0: #{tpu_custom_call.1}
  #allocation0 [shape = 'u32[]', space=smem, size = 0x4, offset = 0x4, fixed_abs, tag = 'smem constant byte address 0x4 - core index']
  #allocation1 [shape = 'u32[144,128]{1,0:T(1,128)}', space=vmem, size = 0x12000, scoped, tag = 'internal scratch']
  %s0 = inlined_call_operand.hbm [shape: f32[16,128], index: 0, kind: input, shape index: {}]
  %s1 = inlined_call_operand.hbm [shape: f32[16,128], index: 1, kind: output, shape index: {}]
  %s2 = sld [smem:[#allocation0]]
  $region18: #{tpu_custom_call.1} parent=0
    _
  %s4 = ssub.s32 1, %s2
  %s5 = scalar_select 0, %s4, %s2
  $region1: #{tpu_custom_call.1} parent=0
    #allocation2 [shape = 'u8[8192]{0}', space=vmem, size = 0x2000, scoped, tag = 'input window, operand 0, single buffered']
    #allocation3 [shape = 's32[1]{0}', space=sflag, size = 0x4, scoped, tag = 'scoped memory for tpu_custom_call.1']
    #allocation4 [shape = 's32[1]{0}', space=sflag, size = 0x4, scoped, tag = 'scoped memory for tpu_custom_call.1']
    #allocation5 [shape = 'u8[8192]{0}', space=vmem, size = 0x2000, scoped, tag = 'output window, operand 0, single buffered']
    %6 = vsyncpa [#allocation3], 0
    %7 = vsyncpa [#allocation4], 0
    // Predicated region
    $region2: #{tpu_custom_call.1} parent=1 // pred_check
      _
    $region3: #{tpu_custom_call.1} parent=1 // pred_check_branch
      %9 = sbr.rel (0) target = $region5
    $region4: #{tpu_custom_call.1} parent=1 // pred_region
      %s11 = ssub.s32 256, 256
      %12 = vsyncadd [#allocation3], %s11
      %s13 = sshll.u32 [#allocation2], 4
      %s14 = int_to_ptr.vmem [resolvable:$true] %s13
      %19 = dma.hbm_to_vmem [thread:$0]  %s0, 256, %s14, [#allocation3], 128, 128, 8
    $region5: #{tpu_custom_call.1} parent=1 // pred_fallthru
      _
    // Predicated region
    $region6: #{tpu_custom_call.1} parent=1 // pred_check
      _
    $region7: #{tpu_custom_call.1} parent=1 // pred_check_branch
      %21 = sbr.rel (0) target = $region9
    $region8: #{tpu_custom_call.1} parent=1 // pred_region
      %22 = dma.done [#allocation3], 256
    $region9: #{tpu_custom_call.1} parent=1 // pred_fallthru
      _
    %v23 = vld [vmem:[#allocation2] sm:$0xff]
    %v24 = vld [vmem:[#allocation2 + $0x8] sm:$0xff]
    %v25 = vand.u32 2147483647, %v23
    %v26 = vand.u32 2147483647, %v24
    %vm27 = vcmp.gt.f32.partialorder %v25, 0.0
    %vm28 = vcmp.gt.f32.partialorder %v26, 0.0
    %v29 = vsel %vm27, %v25, 1e-07
    %v30 = vsel %vm28, %v26, 1e-07
    %v31 = vrsqrt.pop %v29
    %v32 = vmul.f32 %v29, %v31
    %vm33 = vcmp.eq.f32.partialorder %v29, inf
    %v34 = vsel %vm33, %v29, %v32
    %vm35 = vcmp.eq.f32.partialorder %v29, 0.0
    %v36 = vand.u32 %v29, 2147483648
    %v37 = vsel %vm35, %v36, %v34
    %v38 = vrsqrt.pop %v30
    %v39 = vmul.f32 %v30, %v38
    %vm40 = vcmp.eq.f32.partialorder %v30, inf
    %v41 = vsel %vm40, %v30, %v39
    %vm42 = vcmp.eq.f32.partialorder %v30, 0.0
    %v43 = vand.u32 %v30, 2147483648
    %v44 = vsel %vm42, %v43, %v41
    %v45 = vrsqrt.pop %v37
    %v46 = vrsqrt.pop %v44
    %vm47 = vcmp.ge.f32.partialorder %v23, 0.0
    %vm48 = vcmp.ge.f32.partialorder %v24, 0.0
    %v49 = vsub.f32 0.0, %v45
    %v50 = vsub.f32 0.0, %v46
    %v51 = vsel %vm47, %v45, %v49
    %v52 = vsel %vm48, %v46, %v50
    %53 = vst [vmem:[#allocation5] sm:$0xff] %v51
    %54 = vst [vmem:[#allocation5 + $0x8] sm:$0xff] %v52
    // Predicated region
    $region10: #{tpu_custom_call.1} parent=1 // pred_check
      _
    $region11: #{tpu_custom_call.1} parent=1 // pred_check_branch
      %56 = sbr.rel (0) target = $region13
    $region12: #{tpu_custom_call.1} parent=1 // pred_region
      %s58 = ssub.s32 256, 256
      %59 = vsyncadd [#allocation4], %s58
      %s60 = sshll.u32 [#allocation5], 4
      %s61 = int_to_ptr.vmem [resolvable:$true] %s60
      %66 = dma.vmem_to_hbm [thread:$0]  %s61, 256, %s1, [#allocation4], 128, 128, 8
    $region13: #{tpu_custom_call.1} parent=1 // pred_fallthru
      _
    // Predicated region
    $region14: #{tpu_custom_call.1} parent=1 // pred_check
      _
    $region15: #{tpu_custom_call.1} parent=1 // pred_check_branch
      %68 = sbr.rel (0) target = $region17
    $region16: #{tpu_custom_call.1} parent=1 // pred_region
      %69 = dma.done [#allocation4], 256
    $region17: #{tpu_custom_call.1} parent=1 // pred_fallthru
      _
    %70 = vsyncpa [#allocation3], 1
    %71 = vsyncpa [#allocation4], 1

</llo_original>
